<compile_context>
chip_gen: v7x
topology: tpu7x:2x2x1
jax: 0.10.0
libtpu: 0.0.40
codegen_flags: <defaults>
</compile_context>

<pallas_src>
import math

import jax
import jax.numpy as jnp
from jax.experimental import pallas as pl
from jax.experimental.pallas import tpu as pltpu

ACTION_STEP = 0.1
NUM_ACTIONS = int(len(jnp.arange(-1.0, 1.0 + ACTION_STEP, ACTION_STEP)))  # 21, matches np.arange(-1, 1.1, 0.1)
IN_FEATURES = 5
HIDDEN = 128
OUT_PAD = 128            # fc3 padded to 128 columns *inside* the kernel (dense vregs / MXU tiles)
NEG_BIG = -1e30          # bias padding -> exp underflows to exactly 0
SUBLANE = 16             # bf16 sublane packing; batch tiles rounded to this
DEFAULT_TILE_B = 1024    # batch rows per grid step


def _mlp_softmax_kernel(x_ref, w1_ref, b1_ref, w2_ref, b2_ref, w3_ref, b3_ref, o_ref):
    # One batch tile per grid step: 3 bf16 matmuls (MXU, f32 accumulate), f32 tanh, f32 softmax.
    x = x_ref[...]  # already bf16 (pre-cast in the wrapper)

    h1 = jnp.dot(x, w1_ref[...], preferred_element_type=jnp.float32) + b1_ref[...]
    h1 = jnp.tanh(h1)

    h2 = jnp.dot(h1.astype(jnp.bfloat16), w2_ref[...], preferred_element_type=jnp.float32) + b2_ref[...]
    h2 = jnp.tanh(h2)

    logits = jnp.dot(h2.astype(jnp.bfloat16), w3_ref[...], preferred_element_type=jnp.float32) + b3_ref[...]

    # Softmax without the row-max reduction: at PyTorch-default init scale |real logits| <= ~12, so
    # f32 exp cannot overflow; padded lanes sit at ~-1e30 and underflow to exactly 0.
    e = jnp.exp(logits)
    denom = jnp.sum(e, axis=-1, keepdims=True)
    probs = e / denom                      # exact normalization: probabilities sum to 1 (f32 rounding only)

    # Store only the 21 real action columns (lane-masked store, but ~6x less HBM writeback).
    o_ref[...] = probs[:, :NUM_ACTIONS].astype(o_ref.dtype)


def _round_up(v, m):
    return ((v + m - 1) // m) * m


def reinforce_forward(x, params, *, tile_b=DEFAULT_TILE_B):
    """x: (B, 5) float. Returns softmax action probabilities of shape (B, 21), float32."""
    w1, b1, w2, b2, w3p, b3p = params
    B = x.shape[0]

    b_min = _round_up(max(B, 1), SUBLANE)
    # Cap the tile so batches larger than one tile give >= 2 grid steps (v7x megacore sharding).
    half = max(SUBLANE, _round_up((b_min + 1) // 2, SUBLANE))
    tb = max(SUBLANE, min(_round_up(int(tile_b), SUBLANE), half))
    b_pad = _round_up(b_min, tb)

    x = x.astype(jnp.bfloat16)  # MXU operand dtype; halves input DMA, removes in-kernel cast
    if b_pad != B:
        x = jnp.pad(x, ((0, b_pad - B), (0, 0)))  # zero tail rows -> valid (discarded) outputs, no NaNs
    grid = (b_pad // tb,)

    flops = 2 * b_pad * (IN_FEATURES * HIDDEN + HIDDEN * HIDDEN + HIDDEN * OUT_PAD)
    transcendentals = b_pad * (2 * HIDDEN + OUT_PAD)  # tanh x2 + exp
    bytes_accessed = (
        x.size * x.dtype.itemsize
        + sum(int(p.size) * p.dtype.itemsize for p in (w1, b1, w2, b2, w3p, b3p))
        + b_pad * NUM_ACTIONS * 4
    )

    out = pl.pallas_call(
        _mlp_softmax_kernel,
        out_shape=jax.ShapeDtypeStruct((b_pad, NUM_ACTIONS), jnp.float32),
        grid=grid,
        in_specs=[
            pl.BlockSpec((tb, IN_FEATURES), lambda i: (i, 0)),        # x tile
            pl.BlockSpec((IN_FEATURES, HIDDEN), lambda i: (0, 0)),    # w1 (VMEM-resident)
            pl.BlockSpec((1, HIDDEN), lambda i: (0, 0)),              # b1
            pl.BlockSpec((HIDDEN, HIDDEN), lambda i: (0, 0)),         # w2
            pl.BlockSpec((1, HIDDEN), lambda i: (0, 0)),              # b2
            pl.BlockSpec((HIDDEN, OUT_PAD), lambda i: (0, 0)),        # w3 (zero-padded cols)
            pl.BlockSpec((1, OUT_PAD), lambda i: (0, 0)),             # b3 (-1e30-padded)
        ],
        out_specs=pl.BlockSpec((tb, NUM_ACTIONS), lambda i: (i, 0)),  # 21-col f32: minimal writeback
        compiler_params=pltpu.CompilerParams(
            dimension_semantics=("parallel",),
            vmem_limit_bytes=32 * 1024 * 1024,
        ),
        cost_estimate=pl.CostEstimate(
            flops=flops, transcendentals=transcendentals, bytes_accessed=bytes_accessed
        ),
    )(x, w1, b1, w2, b2, w3p, b3p)

    return out[:B]


def init_params_f32(key):
    """PyTorch nn.Linear default init: U(-1/sqrt(fan_in), 1/sqrt(fan_in)).
    Weights materialized directly in (in, out) layout (x @ W + b)."""
    keys = jax.random.split(key, 6)

    def linear(kw, kb, fan_in, fan_out):
        bound = 1.0 / math.sqrt(fan_in)
        w = jax.random.uniform(kw, (fan_in, fan_out), jnp.float32, -bound, bound)
        b = jax.random.uniform(kb, (1, fan_out), jnp.float32, -bound, bound)
        return w, b

    w1, b1 = linear(keys[0], keys[1], IN_FEATURES, HIDDEN)
    w2, b2 = linear(keys[2], keys[3], HIDDEN, HIDDEN)
    w3, b3 = linear(keys[4], keys[5], HIDDEN, NUM_ACTIONS)
    return (w1, b1, w2, b2, w3, b3)


def to_kernel_params(f32_params):
    """bf16 weights (MXU operands), f32 biases; fc3 padded to OUT_PAD columns for dense in-kernel math."""
    w1, b1, w2, b2, w3, b3 = f32_params
    pad = OUT_PAD - NUM_ACTIONS
    w3p = jnp.pad(w3, ((0, 0), (0, pad)))                              # zero weight columns
    b3p = jnp.pad(b3, ((0, 0), (0, pad)), constant_values=NEG_BIG)     # -inf-ish bias -> exp == 0
    return (
        w1.astype(jnp.bfloat16), b1,
        w2.astype(jnp.bfloat16), b2,
        w3p.astype(jnp.bfloat16), b3p,
    )


def reference_forward_mixed(x, kernel_params):
    """Pure-JAX reference mimicking the kernel's bf16-operand / f32-accumulate math."""
    w1, b1, w2, b2, w3p, b3p = kernel_params
    xb = x.astype(jnp.bfloat16)
    h1 = jnp.tanh(jnp.dot(xb, w1, preferred_element_type=jnp.float32) + b1)
    h2 = jnp.tanh(jnp.dot(h1.astype(jnp.bfloat16), w2, preferred_element_type=jnp.float32) + b2)
    logits = jnp.dot(h2.astype(jnp.bfloat16), w3p, preferred_element_type=jnp.float32) + b3p
    return jax.nn.softmax(logits, axis=-1)[:, :NUM_ACTIONS]


def reference_forward_f32(x, f32_params):
    w1, b1, w2, b2, w3, b3 = f32_params
    h1 = jnp.tanh(x @ w1 + b1)
    h2 = jnp.tanh(h1 @ w2 + b2)
    return jax.nn.softmax(h2 @ w3 + b3, axis=-1)


# TODO(synk): get_action / pi / update_weight (host-side epsilon-greedy sampling and the per-step
# autograd REINFORCE update) are training-loop logic with no Pallas forward-kernel equivalent.

if __name__ == "__main__":
    assert NUM_ACTIONS == 21

    key = jax.random.PRNGKey(0)
    k_params, k_x1, k_x2 = jax.random.split(key, 3)

    f32_params = init_params_f32(k_params)
    kernel_params = to_kernel_params(f32_params)

    # Case 1: tiny batch (single grid step), like per-step policy inference.
    x_small = jax.random.normal(k_x1, (8, IN_FEATURES), jnp.float32)
    probs_small = jax.block_until_ready(reinforce_forward(x_small, kernel_params))
    assert probs_small.shape == (8, NUM_ACTIONS)
    assert jnp.allclose(jnp.sum(probs_small, axis=-1), 1.0, atol=2e-3)
    assert jnp.allclose(probs_small, reference_forward_mixed(x_small, kernel_params), atol=2e-3)
    assert jnp.allclose(probs_small, reference_forward_f32(x_small, f32_params), atol=3e-2)

    # Case 2: non-divisible batch with a small tile -> multi-step grid + tail padding path.
    x_big = jax.random.normal(k_x2, (100, IN_FEATURES), jnp.float32)
    probs_big = jax.block_until_ready(reinforce_forward(x_big, kernel_params, tile_b=32))
    assert probs_big.shape == (100, NUM_ACTIONS)
    assert jnp.allclose(jnp.sum(probs_big, axis=-1), 1.0, atol=2e-3)
    assert jnp.allclose(probs_big, reference_forward_mixed(x_big, kernel_params), atol=2e-3)
    assert jnp.allclose(probs_big, reference_forward_f32(x_big, f32_params), atol=3e-2)

    print("KERNEL_OK")
</pallas_src>

<mosaic_0001>
module attributes {stable_mosaic.version = 11 : i64} {
  func.func @_mlp_softmax_kernel(%arg0: i32, %arg1: memref<16x5xbf16, #tpu.memory_space<vmem>>, %arg2: memref<5x128xbf16, #tpu.memory_space<vmem>>, %arg3: memref<1x128xf32, #tpu.memory_space<vmem>>, %arg4: memref<128x128xbf16, #tpu.memory_space<vmem>>, %arg5: memref<1x128xf32, #tpu.memory_space<vmem>>, %arg6: memref<128x128xbf16, #tpu.memory_space<vmem>>, %arg7: memref<1x128xf32, #tpu.memory_space<vmem>>, %arg8: memref<16x21xf32, #tpu.memory_space<vmem>>) attributes {dimension_semantics = [#tpu.dimension_semantics<parallel>], iteration_bounds = array<i64: 1>, scalar_prefetch = 0 : i64, scratch_operands = 0 : i64, tpu.core_type = #tpu.core_type<tc>, window_params = [{transform_indices = @transform_0, window_bounds = array<i64: 16, 5>}, {pipeline_mode = #tpu.pipeline_mode<synchronous>, transform_indices = @transform_1, window_bounds = array<i64: 5, 128>}, {pipeline_mode = #tpu.pipeline_mode<synchronous>, transform_indices = @transform_2, window_bounds = array<i64: 1, 128>}, {pipeline_mode = #tpu.pipeline_mode<synchronous>, transform_indices = @transform_3, window_bounds = array<i64: 128, 128>}, {pipeline_mode = #tpu.pipeline_mode<synchronous>, transform_indices = @transform_4, window_bounds = array<i64: 1, 128>}, {pipeline_mode = #tpu.pipeline_mode<synchronous>, transform_indices = @transform_5, window_bounds = array<i64: 128, 128>}, {pipeline_mode = #tpu.pipeline_mode<synchronous>, transform_indices = @transform_6, window_bounds = array<i64: 1, 128>}, {transform_indices = @transform_7, window_bounds = array<i64: 16, 21>}]} {
    %c0 = arith.constant 0 : index
    %c0_0 = arith.constant 0 : index
    %0 = vector.load %arg1[%c0, %c0_0] : memref<16x5xbf16, #tpu.memory_space<vmem>>, vector<16x5xbf16>
    %c0_1 = arith.constant 0 : index
    %c0_2 = arith.constant 0 : index
    %1 = vector.load %arg2[%c0_1, %c0_2] : memref<5x128xbf16, #tpu.memory_space<vmem>>, vector<5x128xbf16>
    %cst = arith.constant dense<0.000000e+00> : vector<16x128xf32>
    %2 = tpu.matmul %0, %1, %cst {dimension_numbers = #tpu.dot_dimension_numbers<[1], [0], [0], [1], [0, 0, 1, 1], [], []>} : vector<16x5xbf16>, vector<5x128xbf16>, vector<16x128xf32> -> vector<16x128xf32>
    %c0_3 = arith.constant 0 : index
    %c0_4 = arith.constant 0 : index
    %3 = vector.load %arg3[%c0_3, %c0_4] : memref<1x128xf32, #tpu.memory_space<vmem>>, vector<1x128xf32>
    %4 = vector.broadcast %3 : vector<1x128xf32> to vector<16x128xf32>
    %5 = arith.addf %2, %4 : vector<16x128xf32>
    %6 = math.tanh %5 : vector<16x128xf32>
    %7 = arith.truncf %6 : vector<16x128xf32> to vector<16x128xbf16>
    %c0_5 = arith.constant 0 : index
    %c0_6 = arith.constant 0 : index
    %8 = vector.load %arg4[%c0_5, %c0_6] : memref<128x128xbf16, #tpu.memory_space<vmem>>, vector<128x128xbf16>
    %cst_7 = arith.constant dense<0.000000e+00> : vector<16x128xf32>
    %9 = tpu.matmul %7, %8, %cst_7 {dimension_numbers = #tpu.dot_dimension_numbers<[1], [0], [0], [1], [0, 0, 1, 1], [], []>} : vector<16x128xbf16>, vector<128x128xbf16>, vector<16x128xf32> -> vector<16x128xf32>
    %c0_8 = arith.constant 0 : index
    %c0_9 = arith.constant 0 : index
    %10 = vector.load %arg5[%c0_8, %c0_9] : memref<1x128xf32, #tpu.memory_space<vmem>>, vector<1x128xf32>
    %11 = vector.broadcast %10 : vector<1x128xf32> to vector<16x128xf32>
    %12 = arith.addf %9, %11 : vector<16x128xf32>
    %13 = math.tanh %12 : vector<16x128xf32>
    %14 = arith.truncf %13 : vector<16x128xf32> to vector<16x128xbf16>
    %c0_10 = arith.constant 0 : index
    %c0_11 = arith.constant 0 : index
    %15 = vector.load %arg6[%c0_10, %c0_11] : memref<128x128xbf16, #tpu.memory_space<vmem>>, vector<128x128xbf16>
    %cst_12 = arith.constant dense<0.000000e+00> : vector<16x128xf32>
    %16 = tpu.matmul %14, %15, %cst_12 {dimension_numbers = #tpu.dot_dimension_numbers<[1], [0], [0], [1], [0, 0, 1, 1], [], []>} : vector<16x128xbf16>, vector<128x128xbf16>, vector<16x128xf32> -> vector<16x128xf32>
    %c0_13 = arith.constant 0 : index
    %c0_14 = arith.constant 0 : index
    %17 = vector.load %arg7[%c0_13, %c0_14] : memref<1x128xf32, #tpu.memory_space<vmem>>, vector<1x128xf32>
    %18 = vector.broadcast %17 : vector<1x128xf32> to vector<16x128xf32>
    %19 = arith.addf %16, %18 : vector<16x128xf32>
    %20 = math.exp %19 : vector<16x128xf32>
    %cst_15 = arith.constant dense<0.000000e+00> : vector<16xf32>
    %21 = vector.multi_reduction <add>, %20, %cst_15 [1] : vector<16x128xf32> to vector<16xf32>
    %22 = vector.shape_cast %21 : vector<16xf32> to vector<16x1xf32>
    %23 = vector.broadcast %22 : vector<16x1xf32> to vector<16x128xf32>
    %24 = arith.divf %20, %23 : vector<16x128xf32>
    %25 = vector.extract_strided_slice %24 {offsets = [0, 0], sizes = [16, 21], strides = [1, 1]} : vector<16x128xf32> to vector<16x21xf32>
    %c0_16 = arith.constant 0 : index
    %c0_17 = arith.constant 0 : index
    %26 = vector.load %arg8[%c0_16, %c0_17] : memref<16x21xf32, #tpu.memory_space<vmem>>, vector<16x21xf32>
    tpu.vector_store %arg8[%c0_16, %c0_17], %25 {strides = array<i32>} : memref<16x21xf32, #tpu.memory_space<vmem>>, vector<16x21xf32>,
    return
  }
  func.func @transform_0(%arg0: i32) -> (i32, i32) {
    %c0_i32 = arith.constant 0 : i32
    %c0_i32_0 = arith.constant 0 : i32
    return %arg0, %c0_i32 : i32, i32
  }
  func.func @transform_1(%arg0: i32) -> (i32, i32) {
    %c0_i32 = arith.constant 0 : i32
    %c0_i32_0 = arith.constant 0 : i32
    %c0_i32_1 = arith.constant 0 : i32
    return %c0_i32, %c0_i32_0 : i32, i32
  }
  func.func @transform_2(%arg0: i32) -> (i32, i32) {
    %c0_i32 = arith.constant 0 : i32
    %c0_i32_0 = arith.constant 0 : i32
    %c0_i32_1 = arith.constant 0 : i32
    return %c0_i32, %c0_i32_0 : i32, i32
  }
  func.func @transform_3(%arg0: i32) -> (i32, i32) {
    %c0_i32 = arith.constant 0 : i32
    %c0_i32_0 = arith.constant 0 : i32
    %c0_i32_1 = arith.constant 0 : i32
    return %c0_i32, %c0_i32_0 : i32, i32
  }
  func.func @transform_4(%arg0: i32) -> (i32, i32) {
    %c0_i32 = arith.constant 0 : i32
    %c0_i32_0 = arith.constant 0 : i32
    %c0_i32_1 = arith.constant 0 : i32
    return %c0_i32, %c0_i32_0 : i32, i32
  }
  func.func @transform_5(%arg0: i32) -> (i32, i32) {
    %c0_i32 = arith.constant 0 : i32
    %c0_i32_0 = arith.constant 0 : i32
    %c0_i32_1 = arith.constant 0 : i32
    return %c0_i32, %c0_i32_0 : i32, i32
  }
  func.func @transform_6(%arg0: i32) -> (i32, i32) {
    %c0_i32 = arith.constant 0 : i32
    %c0_i32_0 = arith.constant 0 : i32
    %c0_i32_1 = arith.constant 0 : i32
    return %c0_i32, %c0_i32_0 : i32, i32
  }
  func.func @transform_7(%arg0: i32) -> (i32, i32) {
    %c0_i32 = arith.constant 0 : i32
    %c0_i32_0 = arith.constant 0 : i32
    return %arg0, %c0_i32 : i32, i32
  }
}

</mosaic_0001>

<llo_original>
// kernel: tpu_custom_call.1
$region0: #{tpu_custom_call.1}
  #allocation0 [shape = 'u32[]', space=smem, size = 0x4, offset = 0x4, fixed_abs, tag = 'smem constant byte address 0x4 - core index']
  #allocation1 [shape = 'u32[144,128]{1,0:T(1,128)}', space=vmem, size = 0x12000, scoped, tag = 'internal scratch']
  %s0 = inlined_call_operand.vmem [shape: bf16[16,5], index: 0, kind: input, shape index: {}]
  %s1 = inlined_call_operand.vmem [shape: bf16[5,128], index: 1, kind: input, shape index: {}]
  %s2 = inlined_call_operand.vmem [shape: f32[1,128], index: 2, kind: input, shape index: {}]
  %s3 = inlined_call_operand.hbm [shape: bf16[128,128], index: 3, kind: input, shape index: {}]
  %s4 = inlined_call_operand.vmem [shape: f32[1,128], index: 4, kind: input, shape index: {}]
  %s5 = inlined_call_operand.hbm [shape: bf16[128,128], index: 5, kind: input, shape index: {}]
  %s6 = inlined_call_operand.vmem [shape: f32[1,128], index: 6, kind: input, shape index: {}]
  %s7 = inlined_call_operand.hbm [shape: f32[16,21], index: 7, kind: output, shape index: {}]
  %s8 = sld [smem:[#allocation0]]
  $region46: #{tpu_custom_call.1} parent=0
    _
  %s10 = ssub.s32 1, %s8
  %s11 = scalar_select 0, %s10, %s8
  $region1: #{tpu_custom_call.1} parent=0
    #allocation2 [shape = 'u8[32768]{0}', space=vmem, size = 0x8000, scoped, tag = 'input window, operand 3, single buffered']
    #allocation3 [shape = 's32[1]{0}', space=sflag, size = 0x4, scoped, tag = 'scoped memory for tpu_custom_call.1']
    #allocation4 [shape = 's32[1]{0}', space=sflag, size = 0x4, scoped, tag = 'scoped memory for tpu_custom_call.1']
    #allocation5 [shape = 'u8[32768]{0}', space=vmem, size = 0x8000, scoped, tag = 'input window, operand 5, single buffered']
    #allocation6 [shape = 's32[1]{0}', space=sflag, size = 0x4, scoped, tag = 'scoped memory for tpu_custom_call.1']
    #allocation7 [shape = 'u8[8192]{0}', space=vmem, size = 0x2000, scoped, tag = 'output window, operand 0, single buffered']
    %12 = vsyncpa [#allocation3], 0
    %13 = vsyncpa [#allocation6], 0
    %14 = vsyncpa [#allocation4], 0
    // Predicated region
    $region2: #{tpu_custom_call.1} parent=1 // pred_check
      _
    $region3: #{tpu_custom_call.1} parent=1 // pred_check_branch
      %16 = sbr.rel (0) target = $region5
    $region4: #{tpu_custom_call.1} parent=1 // pred_region
      _
    $region5: #{tpu_custom_call.1} parent=1 // pred_fallthru
      _
    // Predicated region
    $region6: #{tpu_custom_call.1} parent=1 // pred_check
      _
    $region7: #{tpu_custom_call.1} parent=1 // pred_check_branch
      %18 = sbr.rel (0) target = $region9
    $region8: #{tpu_custom_call.1} parent=1 // pred_region
      _
    $region9: #{tpu_custom_call.1} parent=1 // pred_fallthru
      _
    // Predicated region
    $region10: #{tpu_custom_call.1} parent=1 // pred_check
      _
    $region11: #{tpu_custom_call.1} parent=1 // pred_check_branch
      %20 = sbr.rel (0) target = $region13
    $region12: #{tpu_custom_call.1} parent=1 // pred_region
      _
    $region13: #{tpu_custom_call.1} parent=1 // pred_fallthru
      _
    // Predicated region
    $region14: #{tpu_custom_call.1} parent=1 // pred_check
      _
    $region15: #{tpu_custom_call.1} parent=1 // pred_check_branch
      %22 = sbr.rel (0) target = $region17
    $region16: #{tpu_custom_call.1} parent=1 // pred_region
      %s24 = ssub.s32 1024, 1024
      %25 = vsyncadd [#allocation3], %s24
      %s26 = sshll.u32 [#allocation2], 4
      %s27 = int_to_ptr.vmem [resolvable:$true] %s26
      %32 = dma.hbm_to_vmem [thread:$0]  %s3, 1024, %s27, [#allocation3], 64, 64, 4
    $region17: #{tpu_custom_call.1} parent=1 // pred_fallthru
      _
    // Predicated region
    $region18: #{tpu_custom_call.1} parent=1 // pred_check
      _
    $region19: #{tpu_custom_call.1} parent=1 // pred_check_branch
      %34 = sbr.rel (0) target = $region21
    $region20: #{tpu_custom_call.1} parent=1 // pred_region
      _
    $region21: #{tpu_custom_call.1} parent=1 // pred_fallthru
      _
    // Predicated region
    $region22: #{tpu_custom_call.1} parent=1 // pred_check
      _
    $region23: #{tpu_custom_call.1} parent=1 // pred_check_branch
      %36 = sbr.rel (0) target = $region25
    $region24: #{tpu_custom_call.1} parent=1 // pred_region
      %s38 = ssub.s32 1024, 1024
      %39 = vsyncadd [#allocation6], %s38
      %s40 = sshll.u32 [#allocation5], 4
      %s41 = int_to_ptr.vmem [resolvable:$true] %s40
      %46 = dma.hbm_to_vmem [thread:$0]  %s5, 1024, %s41, [#allocation6], 64, 64, 4
    $region25: #{tpu_custom_call.1} parent=1 // pred_fallthru
      _
    // Predicated region
    $region26: #{tpu_custom_call.1} parent=1 // pred_check
      _
    $region27: #{tpu_custom_call.1} parent=1 // pred_check_branch
      %48 = sbr.rel (0) target = $region29
    $region28: #{tpu_custom_call.1} parent=1 // pred_region
      _
    $region29: #{tpu_custom_call.1} parent=1 // pred_fallthru
      _
    // Predicated region
    $region30: #{tpu_custom_call.1} parent=1 // pred_check
      _
    $region31: #{tpu_custom_call.1} parent=1 // pred_check_branch
      %50 = sbr.rel (0) target = $region33
    $region32: #{tpu_custom_call.1} parent=1 // pred_region
      %51 = dma.done [#allocation3], 1024
    $region33: #{tpu_custom_call.1} parent=1 // pred_fallthru
      _
    // Predicated region
    $region34: #{tpu_custom_call.1} parent=1 // pred_check
      _
    $region35: #{tpu_custom_call.1} parent=1 // pred_check_branch
      %53 = sbr.rel (0) target = $region37
    $region36: #{tpu_custom_call.1} parent=1 // pred_region
      %54 = dma.done [#allocation6], 1024
    $region37: #{tpu_custom_call.1} parent=1 // pred_fallthru
      _
    %v56 = vld [vmem:[%s0] sm:$0xf]
    %v57 = vld [vmem:[%s0 + $0x4] sm:$0xf]
    %v58 = vld [vmem:[%s1] sm:$0x7]
    %v59 = vld [vmem:[%s2] sm:$0x1]
    %v61 = vlaneseq
    %v62 = vshrl.u32 %v61, 7
    %v63 = vsub.s32 0, %v62
    %v64 = vrot.slane %v59, %v63
    %v68 = vunpack.c.l.b16 %v56
    %v69 = vunpack.c.l.b16 %v57
    %v70 = vpack.c.b16 %v69, %v68
    %vm71 = vcmask 39936
    %v73 = vsel %vm71, %v70, 0
    %vm75 = vcmask 1041408
    %vm76 = vcmask 1042432
    %v77 = vsel %vm75, 4294967295, 65535
    %v78 = vsel %vm76, %v77, 0
    %v80 = vand.u32 %v58, %v78
    %82 = vmatprep.subr.bf16.mxu0 0
    %83 = vmatpush1.bf16.msra.mxu0 %v80
    %84 = vmatprep.subr.bf16.mxu0 0
    %85 = vmatpush1.bf16.msra.mxu0 0
    %86 = vmatprep.subr.bf16.mxu0 0
    %87 = vmatpush1.bf16.msra.mxu0 0
    %88 = vmatprep.subr.bf16.mxu0 0
    %89 = vmatpush1.bf16.msra.mxu0 0
    %90 = vmatprep.subr.bf16.mxu0 0
    %91 = vmatpush1.bf16.msra.mxu0 0
    %92 = vmatprep.subr.bf16.mxu0 0
    %93 = vmatpush1.bf16.msra.mxu0 0
    %94 = vmatprep.subr.bf16.mxu0 0
    %95 = vmatpush1.bf16.msra.mxu0 0
    %96 = vmatprep.subr.bf16.mxu0 0
    %97 = vmatpush1.bf16.msra.mxu0 0
    %98 = vmatprep.subr.bf16.mxu0 0
    %99 = vmatpush1.bf16.msra.mxu0 0
    %100 = vmatprep.subr.bf16.mxu0 0
    %101 = vmatpush1.bf16.msra.mxu0 0
    %102 = vmatprep.subr.bf16.mxu0 0
    %103 = vmatpush1.bf16.msra.mxu0 0
    %104 = vmatprep.subr.bf16.mxu0 0
    %105 = vmatpush1.bf16.msra.mxu0 0
    %106 = vmatprep.subr.bf16.mxu0 0
    %107 = vmatpush1.bf16.msra.mxu0 0
    %108 = vmatprep.subr.bf16.mxu0 0
    %109 = vmatpush1.bf16.msra.mxu0 0
    %110 = vmatprep.subr.bf16.mxu0 0
    %111 = vmatpush1.bf16.msra.mxu0 0
    %112 = vmatprep.subr.bf16.mxu0 0
    %113 = vmatpush1.bf16.msra.mxu0 0
    %114 = vmatprep.mubr.bf16.mxu0 0
    %115 = vmatmul.mubr.bf16.gmra.mrb[0].mxu0 %v73
    %v116 = vpop.f32.mrb[0].mxu0
    %v117 = vadd.f32 %v64, %v116
    %v118 = vpop.f32.mrb[0].mxu0
    %v119 = vpop.f32.mrb[0].mxu0
    %v120 = vadd.f32 %v64, %v119
    %v121 = vpop.f32.mrb[0].mxu0
    %122 = vdwg.mxu0
    %v123 = vtanh.pop %v117
    %v124 = vtanh.pop %v120
    %v125 = vpack.c.bf16 %v124, %v123
    %v126 = vld [vmem:[#allocation2] sm:$0xf]
    %v127 = vld [vmem:[#allocation2 + $0x4] sm:$0xf]
    %v128 = vld [vmem:[#allocation2 + $0x8] sm:$0xf]
    %v129 = vld [vmem:[#allocation2 + $0xc] sm:$0xf]
    %v130 = vld [vmem:[#allocation2 + $0x10] sm:$0xf]
    %v131 = vld [vmem:[#allocation2 + $0x14] sm:$0xf]
    %v132 = vld [vmem:[#allocation2 + $0x18] sm:$0xf]
    %v133 = vld [vmem:[#allocation2 + $0x1c] sm:$0xf]
    %v134 = vld [vmem:[#allocation2 + $0x20] sm:$0xf]
    %v135 = vld [vmem:[#allocation2 + $0x24] sm:$0xf]
    %v136 = vld [vmem:[#allocation2 + $0x28] sm:$0xf]
    %v137 = vld [vmem:[#allocation2 + $0x2c] sm:$0xf]
    %v138 = vld [vmem:[#allocation2 + $0x30] sm:$0xf]
    %v139 = vld [vmem:[#allocation2 + $0x34] sm:$0xf]
    %v140 = vld [vmem:[#allocation2 + $0x38] sm:$0xf]
    %v141 = vld [vmem:[#allocation2 + $0x3c] sm:$0xf]
    %v142 = vld [vmem:[%s4] sm:$0x1]
    %v144 = vlaneseq
    %v145 = vshrl.u32 %v144, 7
    %v146 = vsub.s32 0, %v145
    %v147 = vrot.slane %v142, %v146
    %v165 = vunpack.c.l.b16 %v126
    %v166 = vunpack.c.l.b16 %v127
    %v167 = vunpack.c.l.b16 %v128
    %v168 = vunpack.c.l.b16 %v129
    %v169 = vunpack.c.l.b16 %v130
    %v170 = vunpack.c.l.b16 %v131
    %v171 = vunpack.c.l.b16 %v132
    %v172 = vunpack.c.l.b16 %v133
    %v173 = vunpack.c.l.b16 %v134
    %v174 = vunpack.c.l.b16 %v135
    %v175 = vunpack.c.l.b16 %v136
    %v176 = vunpack.c.l.b16 %v137
    %v177 = vunpack.c.l.b16 %v138
    %v178 = vunpack.c.l.b16 %v139
    %v179 = vunpack.c.l.b16 %v140
    %v180 = vunpack.c.l.b16 %v141
    %v181 = vpack.c.b16 %v166, %v165
    %v182 = vpack.c.b16 %v168, %v167
    %v183 = vpack.c.b16 %v170, %v169
    %v184 = vpack.c.b16 %v172, %v171
    %v185 = vpack.c.b16 %v174, %v173
    %v186 = vpack.c.b16 %v176, %v175
    %v187 = vpack.c.b16 %v178, %v177
    %v188 = vpack.c.b16 %v180, %v179
    %197 = vmatprep.subr.bf16.mxu0 0
    %198 = vmatpush1.bf16.msra.mxu0 %v181
    %199 = vmatprep.subr.bf16.mxu0 0
    %200 = vmatpush1.bf16.msra.mxu0 %v182
    %201 = vmatprep.subr.bf16.mxu0 0
    %202 = vmatpush1.bf16.msra.mxu0 %v183
    %203 = vmatprep.subr.bf16.mxu0 0
    %204 = vmatpush1.bf16.msra.mxu0 %v184
    %205 = vmatprep.subr.bf16.mxu0 0
    %206 = vmatpush1.bf16.msra.mxu0 %v185
    %207 = vmatprep.subr.bf16.mxu0 0
    %208 = vmatpush1.bf16.msra.mxu0 %v186
    %209 = vmatprep.subr.bf16.mxu0 0
    %210 = vmatpush1.bf16.msra.mxu0 %v187
    %211 = vmatprep.subr.bf16.mxu0 0
    %212 = vmatpush1.bf16.msra.mxu0 %v188
    %213 = vmatprep.subr.bf16.mxu0 0
    %214 = vmatpush1.bf16.msra.mxu0 0
    %215 = vmatprep.subr.bf16.mxu0 0
    %216 = vmatpush1.bf16.msra.mxu0 0
    %217 = vmatprep.subr.bf16.mxu0 0
    %218 = vmatpush1.bf16.msra.mxu0 0
    %219 = vmatprep.subr.bf16.mxu0 0
    %220 = vmatpush1.bf16.msra.mxu0 0
    %221 = vmatprep.subr.bf16.mxu0 0
    %222 = vmatpush1.bf16.msra.mxu0 0
    %223 = vmatprep.subr.bf16.mxu0 0
    %224 = vmatpush1.bf16.msra.mxu0 0
    %225 = vmatprep.subr.bf16.mxu0 0
    %226 = vmatpush1.bf16.msra.mxu0 0
    %227 = vmatprep.subr.bf16.mxu0 0
    %228 = vmatpush1.bf16.msra.mxu0 0
    %229 = vmatprep.mubr.bf16.mxu0 0
    %230 = vmatmul.mubr.bf16.gmra.mrb[0].mxu0 %v125
    %v231 = vpop.f32.mrb[0].mxu0
    %v232 = vadd.f32 %v147, %v231
    %v233 = vpop.f32.mrb[0].mxu0
    %v234 = vpop.f32.mrb[0].mxu0
    %v235 = vadd.f32 %v147, %v234
    %v236 = vpop.f32.mrb[0].mxu0
    %237 = vdwg.mxu0
    %v238 = vtanh.pop %v232
    %v239 = vtanh.pop %v235
    %v240 = vpack.c.bf16 %v239, %v238
    %v241 = vld [vmem:[#allocation5] sm:$0xf]
    %v242 = vld [vmem:[#allocation5 + $0x4] sm:$0xf]
    %v243 = vld [vmem:[#allocation5 + $0x8] sm:$0xf]
    %v244 = vld [vmem:[#allocation5 + $0xc] sm:$0xf]
    %v245 = vld [vmem:[#allocation5 + $0x10] sm:$0xf]
    %v246 = vld [vmem:[#allocation5 + $0x14] sm:$0xf]
    %v247 = vld [vmem:[#allocation5 + $0x18] sm:$0xf]
    %v248 = vld [vmem:[#allocation5 + $0x1c] sm:$0xf]
    %v249 = vld [vmem:[#allocation5 + $0x20] sm:$0xf]
    %v250 = vld [vmem:[#allocation5 + $0x24] sm:$0xf]
    %v251 = vld [vmem:[#allocation5 + $0x28] sm:$0xf]
    %v252 = vld [vmem:[#allocation5 + $0x2c] sm:$0xf]
    %v253 = vld [vmem:[#allocation5 + $0x30] sm:$0xf]
    %v254 = vld [vmem:[#allocation5 + $0x34] sm:$0xf]
    %v255 = vld [vmem:[#allocation5 + $0x38] sm:$0xf]
    %v256 = vld [vmem:[#allocation5 + $0x3c] sm:$0xf]
    %v257 = vld [vmem:[%s6] sm:$0x1]
    %v259 = vlaneseq
    %v260 = vshrl.u32 %v259, 7
    %v261 = vsub.s32 0, %v260
    %v262 = vrot.slane %v257, %v261
    %v280 = vunpack.c.l.b16 %v241
    %v281 = vunpack.c.l.b16 %v242
    %v282 = vunpack.c.l.b16 %v243
    %v283 = vunpack.c.l.b16 %v244
    %v284 = vunpack.c.l.b16 %v245
    %v285 = vunpack.c.l.b16 %v246
    %v286 = vunpack.c.l.b16 %v247
    %v287 = vunpack.c.l.b16 %v248
    %v288 = vunpack.c.l.b16 %v249
    %v289 = vunpack.c.l.b16 %v250
    %v290 = vunpack.c.l.b16 %v251
    %v291 = vunpack.c.l.b16 %v252
    %v292 = vunpack.c.l.b16 %v253
    %v293 = vunpack.c.l.b16 %v254
    %v294 = vunpack.c.l.b16 %v255
    %v295 = vunpack.c.l.b16 %v256
    %v296 = vpack.c.b16 %v281, %v280
    %v297 = vpack.c.b16 %v283, %v282
    %v298 = vpack.c.b16 %v285, %v284
    %v299 = vpack.c.b16 %v287, %v286
    %v300 = vpack.c.b16 %v289, %v288
    %v301 = vpack.c.b16 %v291, %v290
    %v302 = vpack.c.b16 %v293, %v292
    %v303 = vpack.c.b16 %v295, %v294
    %312 = vmatprep.subr.bf16.mxu0 0
    %313 = vmatpush1.bf16.msra.mxu0 %v296
    %314 = vmatprep.subr.bf16.mxu0 0
    %315 = vmatpush1.bf16.msra.mxu0 %v297
    %316 = vmatprep.subr.bf16.mxu0 0
    %317 = vmatpush1.bf16.msra.mxu0 %v298
    %318 = vmatprep.subr.bf16.mxu0 0
    %319 = vmatpush1.bf16.msra.mxu0 %v299
    %320 = vmatprep.subr.bf16.mxu0 0
    %321 = vmatpush1.bf16.msra.mxu0 %v300
    %322 = vmatprep.subr.bf16.mxu0 0
    %323 = vmatpush1.bf16.msra.mxu0 %v301
    %324 = vmatprep.subr.bf16.mxu0 0
    %325 = vmatpush1.bf16.msra.mxu0 %v302
    %326 = vmatprep.subr.bf16.mxu0 0
    %327 = vmatpush1.bf16.msra.mxu0 %v303
    %328 = vmatprep.subr.bf16.mxu0 0
    %329 = vmatpush1.bf16.msra.mxu0 0
    %330 = vmatprep.subr.bf16.mxu0 0
    %331 = vmatpush1.bf16.msra.mxu0 0
    %332 = vmatprep.subr.bf16.mxu0 0
    %333 = vmatpush1.bf16.msra.mxu0 0
    %334 = vmatprep.subr.bf16.mxu0 0
    %335 = vmatpush1.bf16.msra.mxu0 0
    %336 = vmatprep.subr.bf16.mxu0 0
    %337 = vmatpush1.bf16.msra.mxu0 0
    %338 = vmatprep.subr.bf16.mxu0 0
    %339 = vmatpush1.bf16.msra.mxu0 0
    %340 = vmatprep.subr.bf16.mxu0 0
    %341 = vmatpush1.bf16.msra.mxu0 0
    %342 = vmatprep.subr.bf16.mxu0 0
    %343 = vmatpush1.bf16.msra.mxu0 0
    %344 = vmatprep.mubr.bf16.mxu0 0
    %345 = vmatmul.mubr.bf16.gmra.mrb[0].mxu0 %v240
    %v346 = vpop.f32.mrb[0].mxu0
    %v347 = vadd.f32 %v262, %v346
    %v348 = vpop.f32.mrb[0].mxu0
    %v349 = vpop.f32.mrb[0].mxu0
    %v350 = vadd.f32 %v262, %v349
    %v351 = vpop.f32.mrb[0].mxu0
    %352 = vdwg.mxu0
    %v353 = vmul.f32 %v347, 1.442695
    %v354 = vpow.pop %v353
    %v355 = vmul.f32 %v350, 1.442695
    %v356 = vpow.pop %v355
    %357 = vadd.xlane.f32.xlu0 %v354
    %v358 = vpop.xlane.xlu0 %357
    %359 = vadd.xlane.f32.xlu0 %v356
    %v360 = vpop.xlane.xlu0 %359
    %v361 = vrcp.pop %v358
    %v362 = vmul.f32 %v354, %v361
    %v363 = vrcp.pop %v360
    %v364 = vmul.f32 %v356, %v363
    %vm365 = vcmask 171008
    %366 = vst.msk [vmem:[#allocation7] sm:$0xff] %vm365, %v362
    %367 = vst.msk [vmem:[#allocation7 + $0x8] sm:$0xff] %vm365, %v364
    // Predicated region
    $region38: #{tpu_custom_call.1} parent=1 // pred_check
      _
    $region39: #{tpu_custom_call.1} parent=1 // pred_check_branch
      %369 = sbr.rel (0) target = $region41
    $region40: #{tpu_custom_call.1} parent=1 // pred_region
      %s371 = ssub.s32 256, 256
      %372 = vsyncadd [#allocation4], %s371
      %s373 = sshll.u32 [#allocation7], 4
      %s374 = int_to_ptr.vmem [resolvable:$true] %s373
      %379 = dma.vmem_to_hbm [thread:$0]  %s374, 256, %s7, [#allocation4], 128, 128, 8
    $region41: #{tpu_custom_call.1} parent=1 // pred_fallthru
      _
    // Predicated region
    $region42: #{tpu_custom_call.1} parent=1 // pred_check
      _
    $region43: #{tpu_custom_call.1} parent=1 // pred_check_branch
      %381 = sbr.rel (0) target = $region45
    $region44: #{tpu_custom_call.1} parent=1 // pred_region
      %382 = dma.done [#allocation4], 256
    $region45: #{tpu_custom_call.1} parent=1 // pred_fallthru
      _
    %383 = vsyncpa [#allocation3], 1
    %384 = vsyncpa [#allocation6], 1
    %385 = vsyncpa [#allocation4], 1

</llo_original>
